<compile_context>
chip_gen: v6e
topology: v6e:2x2x1
jax: 0.10.0
libtpu: 0.0.40
codegen_flags: <defaults>
</compile_context>

<pallas_src>
import jax
import jax.numpy as jnp
from jax.experimental import pallas as pl
from jax.experimental.pallas import tpu as pltpu


def _round_up(x, m):
    return ((x + m - 1) // m) * m


def _linear_kernel(x_ref, wt_ref, b_ref, o_ref):
    # x_ref: (TB, F); wt_ref: (F, Lp) pre-transposed (MXU-native [M,K]x[K,N]);
    # b_ref: (1, Lp) f32; o_ref: (TB, Lp).
    acc = jnp.dot(x_ref[...], wt_ref[...], preferred_element_type=jnp.float32)
    acc = acc + b_ref[...]
    o_ref[...] = acc.astype(o_ref.dtype)


def roberta_classification_head(features, weight, bias, *, block_b=1024,
                                use_pallas=None, keep_lane_padding=False,
                                small_batch_threshold=256):
    """features: [B, 2H]; weight: [num_labels, 2H] (PyTorch layout); bias: [num_labels].

    block_b:            target batch-tile size (clamped to a multiple of 8, <= B).
    use_pallas:         None = auto (jnp fallback for tiny B), True/False to force.
    keep_lane_padding:  if True, return the lane-padded [B, Lp] output (padded label
                        columns are exact zeros) and skip the post-kernel slice.
    """
    B, F = features.shape
    L, F_w = weight.shape
    assert F_w == F, "weight must be [num_labels, 2*hidden]"
    out_dtype = features.dtype

    # --- small-batch fallback: pallas_call fixed cost dominates sub-µs work ---------
    if use_pallas is None:
        use_pallas = B >= small_batch_threshold
    if not use_pallas:
        out = jnp.dot(features, weight.astype(features.dtype).T) \
              + bias.astype(features.dtype)
        return out.astype(out_dtype)

    # --- prepare (tiny) weight / bias: cast + lane-pad + one-time transpose ----------
    # Cast only the weight to the features dtype (do NOT cast the dominant x stream).
    w = weight.astype(features.dtype)
    Lp = _round_up(L, 128)                      # lane-dense output -> unmasked vst
    if Lp != L:
        w = jnp.pad(w, ((0, Lp - L), (0, 0)))   # padded rows are zero -> zero outputs
        bias_p = jnp.pad(bias, (0, Lp - L))
    else:
        bias_p = bias
    wt = jnp.transpose(w)                       # [F, Lp], one-time, ~1 MB at most
    b2d = bias_p.reshape(1, Lp).astype(jnp.float32)

    # --- batch tiling: no padding of features; ragged last block handled by Pallas ---
    if B < 8:
        TB = B                                  # full-dim block is always legal
    else:
        TB = max(8, (min(block_b, B) // 8) * 8)  # multiple of 8, TB <= B
        # Keep >=2 grid steps when possible so the "parallel" axis can shard
        # across both v7x TensorCores (harmless ~0.35 µs on v5e/v6e).
        if pl.cdiv(B, TB) < 2 and B >= 16:
            TB = max(8, _round_up(-(-B // 2), 8))
    grid = (pl.cdiv(B, TB),)

    # --- VMEM / cost bookkeeping ------------------------------------------------------
    in_itemsize = jnp.dtype(features.dtype).itemsize
    out_itemsize = jnp.dtype(out_dtype).itemsize
    vmem_est = (2 * TB * F * in_itemsize        # x double buffer
                + 2 * F * Lp * in_itemsize      # weight (conservatively x2)
                + 2 * Lp * 4                    # bias
                + 2 * TB * Lp * out_itemsize)   # output double buffer
    compiler_kwargs = dict(dimension_semantics=("parallel",))
    if vmem_est > 30 * 1024 * 1024:
        compiler_kwargs["vmem_limit_bytes"] = int(vmem_est * 5 // 4)

    cost = pl.CostEstimate(
        flops=2 * B * F * Lp,
        transcendentals=0,
        bytes_accessed=(B * F * in_itemsize
                        + F * Lp * in_itemsize
                        + Lp * 4
                        + B * Lp * out_itemsize),
    )

    out = pl.pallas_call(
        _linear_kernel,
        out_shape=jax.ShapeDtypeStruct((B, Lp), out_dtype),
        grid_spec=pltpu.PrefetchScalarGridSpec(
            num_scalar_prefetch=0,
            grid=grid,
            in_specs=[
                pl.BlockSpec((TB, F), lambda i: (i, 0)),   # x tile, pipelined over batch
                pl.BlockSpec((F, Lp), lambda i: (0, 0)),   # whole weight, resident
                pl.BlockSpec((1, Lp), lambda i: (0, 0)),   # bias, resident
            ],
            out_specs=pl.BlockSpec((TB, Lp), lambda i: (i, 0)),
        ),
        compiler_params=pltpu.CompilerParams(**compiler_kwargs),
        cost_estimate=cost,
    )(features, wt, b2d)

    if keep_lane_padding or Lp == L:
        return out                              # [B, Lp]; padded columns are zeros
    return out[:, :L]


if __name__ == "__main__":
    # Small config consistent with the module: hidden_size=32 -> in_features=64,
    # num_labels=4, batch=2.
    hidden_size = 32
    num_labels = 4
    batch = 2
    in_features = hidden_size * 2

    key = jax.random.PRNGKey(0)
    k_feat, k_w, k_b = jax.random.split(key, 3)

    features = jax.random.normal(k_feat, (batch, in_features), dtype=jnp.float32)
    # nn.Linear shapes: weight [out, in], bias [out].
    weight = jax.random.normal(k_w, (num_labels, in_features), dtype=jnp.float32) * 0.02
    bias = jax.random.normal(k_b, (num_labels,), dtype=jnp.float32) * 0.02

    ref = features @ weight.T + bias

    # 1) Auto path: tiny batch takes the jnp fallback.
    out_auto = jax.block_until_ready(
        roberta_classification_head(features, weight, bias))
    assert out_auto.shape == (batch, num_labels)
    assert jnp.allclose(out_auto, ref, atol=1e-5, rtol=1e-5)

    # 2) Forced Pallas path at the tiny shape (single full-dim block).
    out_pl = jax.block_until_ready(
        roberta_classification_head(features, weight, bias, use_pallas=True))
    assert out_pl.shape == (batch, num_labels)
    assert jnp.allclose(out_pl, ref, atol=1e-5, rtol=1e-5)

    # 3) Larger batch exercising multi-tile grid + ragged (unpadded) last block.
    batch2 = 300
    feats2 = jax.random.normal(jax.random.PRNGKey(1), (batch2, in_features),
                               dtype=jnp.float32)
    out2 = jax.block_until_ready(
        roberta_classification_head(feats2, weight, bias, block_b=128,
                                    use_pallas=True))
    ref2 = feats2 @ weight.T + bias
    assert out2.shape == (batch2, num_labels)
    assert jnp.allclose(out2, ref2, atol=1e-5, rtol=1e-5)

    # 4) Lane-padded output path (skips the post-kernel slice); padded cols are zeros.
    out3 = jax.block_until_ready(
        roberta_classification_head(feats2, weight, bias, block_b=128,
                                    use_pallas=True, keep_lane_padding=True))
    assert out3.shape == (batch2, 128)
    assert jnp.allclose(out3[:, :num_labels], ref2, atol=1e-5, rtol=1e-5)
    assert jnp.allclose(out3[:, num_labels:], 0.0)

    # TODO(synk): nn.Dropout exists in __init__ but is never applied in forward;
    # intentionally omitted.
    print("KERNEL_OK")
</pallas_src>

<mosaic_0001>
module attributes {stable_mosaic.version = 11 : i64} {
  func.func @_linear_kernel(%arg0: i32, %arg1: memref<2x64xf32, #tpu.memory_space<vmem>>, %arg2: memref<64x128xf32, #tpu.memory_space<vmem>>, %arg3: memref<1x128xf32, #tpu.memory_space<vmem>>, %arg4: memref<2x128xf32, #tpu.memory_space<vmem>>) attributes {dimension_semantics = [#tpu.dimension_semantics<parallel>], iteration_bounds = array<i64: 1>, scalar_prefetch = 0 : i64, scratch_operands = 0 : i64, tpu.core_type = #tpu.core_type<tc>, window_params = [{transform_indices = @transform_0, window_bounds = array<i64: 2, 64>}, {pipeline_mode = #tpu.pipeline_mode<synchronous>, transform_indices = @transform_1, window_bounds = array<i64: 64, 128>}, {pipeline_mode = #tpu.pipeline_mode<synchronous>, transform_indices = @transform_2, window_bounds = array<i64: 1, 128>}, {transform_indices = @transform_3, window_bounds = array<i64: 2, 128>}]} {
    %c0 = arith.constant 0 : index
    %c0_0 = arith.constant 0 : index
    %0 = vector.load %arg1[%c0, %c0_0] : memref<2x64xf32, #tpu.memory_space<vmem>>, vector<2x64xf32>
    %c0_1 = arith.constant 0 : index
    %c0_2 = arith.constant 0 : index
    %1 = vector.load %arg2[%c0_1, %c0_2] : memref<64x128xf32, #tpu.memory_space<vmem>>, vector<64x128xf32>
    %cst = arith.constant dense<0.000000e+00> : vector<2x128xf32>
    %2 = tpu.matmul %0, %1, %cst {dimension_numbers = #tpu.dot_dimension_numbers<[1], [0], [0], [1], [0, 0, 1, 1], [], []>} : vector<2x64xf32>, vector<64x128xf32>, vector<2x128xf32> -> vector<2x128xf32>
    %c0_3 = arith.constant 0 : index
    %c0_4 = arith.constant 0 : index
    %3 = vector.load %arg3[%c0_3, %c0_4] : memref<1x128xf32, #tpu.memory_space<vmem>>, vector<1x128xf32>
    %4 = vector.broadcast %3 : vector<1x128xf32> to vector<2x128xf32>
    %5 = arith.addf %2, %4 : vector<2x128xf32>
    %c0_5 = arith.constant 0 : index
    %c0_6 = arith.constant 0 : index
    %6 = vector.load %arg4[%c0_5, %c0_6] : memref<2x128xf32, #tpu.memory_space<vmem>>, vector<2x128xf32>
    tpu.vector_store %arg4[%c0_5, %c0_6], %5 {strides = array<i32>} : memref<2x128xf32, #tpu.memory_space<vmem>>, vector<2x128xf32>,
    return
  }
  func.func @transform_0(%arg0: i32) -> (i32, i32) {
    %c0_i32 = arith.constant 0 : i32
    %c0_i32_0 = arith.constant 0 : i32
    return %arg0, %c0_i32 : i32, i32
  }
  func.func @transform_1(%arg0: i32) -> (i32, i32) {
    %c0_i32 = arith.constant 0 : i32
    %c0_i32_0 = arith.constant 0 : i32
    %c0_i32_1 = arith.constant 0 : i32
    return %c0_i32, %c0_i32_0 : i32, i32
  }
  func.func @transform_2(%arg0: i32) -> (i32, i32) {
    %c0_i32 = arith.constant 0 : i32
    %c0_i32_0 = arith.constant 0 : i32
    %c0_i32_1 = arith.constant 0 : i32
    return %c0_i32, %c0_i32_0 : i32, i32
  }
  func.func @transform_3(%arg0: i32) -> (i32, i32) {
    %c0_i32 = arith.constant 0 : i32
    %c0_i32_0 = arith.constant 0 : i32
    return %arg0, %c0_i32 : i32, i32
  }
}

</mosaic_0001>

<llo_original>
// kernel: tpu_custom_call.1
$region0: #{tpu_custom_call.1}
  #allocation0 [shape = 'u32[]', space=smem, size = 0x4, offset = 0x4, fixed_abs, tag = 'smem constant byte address 0x4 - core index']
  #allocation1 [shape = 'u32[144,128]{1,0:T(1,128)}', space=vmem, size = 0x12000, scoped, tag = 'internal scratch']
  %s0 = inlined_call_operand.hbm [shape: f32[2,64], index: 0, kind: input, shape index: {}]
  %s1 = inlined_call_operand.hbm [shape: f32[64,128], index: 1, kind: input, shape index: {}]
  %s2 = inlined_call_operand.vmem [shape: f32[1,128], index: 2, kind: input, shape index: {}]
  %s3 = inlined_call_operand.hbm [shape: f32[2,128], index: 3, kind: output, shape index: {}]
  %s4 = sld [smem:[#allocation0]]
  $region30: #{tpu_custom_call.1} parent=0
    _
  %s6 = ssub.s32 1, %s4
  %s7 = scalar_select 0, %s6, %s4
  $region1: #{tpu_custom_call.1} parent=0
    #allocation2 [shape = 'u8[1024]{0}', space=vmem, size = 0x400, scoped, tag = 'input window, operand 0, single buffered']
    #allocation3 [shape = 's32[1]{0}', space=sflag, size = 0x4, scoped, tag = 'scoped memory for tpu_custom_call.1']
    #allocation4 [shape = 's32[1]{0}', space=sflag, size = 0x4, scoped, tag = 'scoped memory for tpu_custom_call.1']
    #allocation5 [shape = 'u8[32768]{0}', space=vmem, size = 0x8000, scoped, tag = 'input window, operand 1, single buffered']
    #allocation6 [shape = 's32[1]{0}', space=sflag, size = 0x4, scoped, tag = 'scoped memory for tpu_custom_call.1']
    #allocation7 [shape = 'u8[1024]{0}', space=vmem, size = 0x400, scoped, tag = 'output window, operand 0, single buffered']
    %8 = vsyncpa [#allocation3], 0
    %9 = vsyncpa [#allocation6], 0
    %10 = vsyncpa [#allocation4], 0
    // Predicated region
    $region2: #{tpu_custom_call.1} parent=1 // pred_check
      _
    $region3: #{tpu_custom_call.1} parent=1 // pred_check_branch
      %12 = sbr.rel (0) target = $region5
    $region4: #{tpu_custom_call.1} parent=1 // pred_region
      %s14 = ssub.s32 32, 32
      %15 = vsyncadd [#allocation3], %s14
      %s17 = sshll.u32 [#allocation2], 4
      %s18 = int_to_ptr.vmem [resolvable:$true] %s17
      %20 = dma.hbm_to_vmem [thread:$0]  %s0, 32, %s18, [#allocation3]
    $region5: #{tpu_custom_call.1} parent=1 // pred_fallthru
      _
    // Predicated region
    $region6: #{tpu_custom_call.1} parent=1 // pred_check
      _
    $region7: #{tpu_custom_call.1} parent=1 // pred_check_branch
      %22 = sbr.rel (0) target = $region9
    $region8: #{tpu_custom_call.1} parent=1 // pred_region
      %s24 = ssub.s32 1024, 1024
      %25 = vsyncadd [#allocation6], %s24
      %s26 = sshll.u32 [#allocation5], 4
      %s27 = int_to_ptr.vmem [resolvable:$true] %s26
      %32 = dma.hbm_to_vmem [thread:$0]  %s1, 1024, %s27, [#allocation6], 128, 128, 8
    $region9: #{tpu_custom_call.1} parent=1 // pred_fallthru
      _
    // Predicated region
    $region10: #{tpu_custom_call.1} parent=1 // pred_check
      _
    $region11: #{tpu_custom_call.1} parent=1 // pred_check_branch
      %34 = sbr.rel (0) target = $region13
    $region12: #{tpu_custom_call.1} parent=1 // pred_region
      _
    $region13: #{tpu_custom_call.1} parent=1 // pred_fallthru
      _
    // Predicated region
    $region14: #{tpu_custom_call.1} parent=1 // pred_check
      _
    $region15: #{tpu_custom_call.1} parent=1 // pred_check_branch
      %36 = sbr.rel (0) target = $region17
    $region16: #{tpu_custom_call.1} parent=1 // pred_region
      %37 = dma.done [#allocation3], 32
    $region17: #{tpu_custom_call.1} parent=1 // pred_fallthru
      _
    // Predicated region
    $region18: #{tpu_custom_call.1} parent=1 // pred_check
      _
    $region19: #{tpu_custom_call.1} parent=1 // pred_check_branch
      %39 = sbr.rel (0) target = $region21
    $region20: #{tpu_custom_call.1} parent=1 // pred_region
      %40 = dma.done [#allocation6], 1024
    $region21: #{tpu_custom_call.1} parent=1 // pred_fallthru
      _
    %v41 = vld [vmem:[#allocation2] sm:$0x3]
    %v42 = vld [vmem:[#allocation5] sm:$0xff]
    %v43 = vld [vmem:[#allocation5 + $0x8] sm:$0xff]
    %v44 = vld [vmem:[#allocation5 + $0x10] sm:$0xff]
    %v45 = vld [vmem:[#allocation5 + $0x18] sm:$0xff]
    %v46 = vld [vmem:[#allocation5 + $0x20] sm:$0xff]
    %v47 = vld [vmem:[#allocation5 + $0x28] sm:$0xff]
    %v48 = vld [vmem:[#allocation5 + $0x30] sm:$0xff]
    %v49 = vld [vmem:[#allocation5 + $0x38] sm:$0xff]
    %v50 = vld [vmem:[%s2] sm:$0x1]
    %v52 = vlaneseq
    %v53 = vshrl.u32 %v52, 7
    %v54 = vsub.s32 0, %v53
    %v55 = vrot.slane %v50, %v54
    %vm57 = vcmask 523264
    %v59 = vsel %vm57, %v41, 0
    %61 = vmatprep.subr.mxu0 0.0
    %62 = vmatpush1.msra.mxu0 0.0
    %63 = vmatprep.subr.mxu0 0.0
    %64 = vmatpush1.msra.mxu0 0.0
    %65 = vmatprep.subr.mxu0 0.0
    %66 = vmatpush1.msra.mxu0 0.0
    %67 = vmatprep.subr.mxu0 0.0
    %68 = vmatpush1.msra.mxu0 0.0
    %69 = vmatprep.subr.mxu0 0.0
    %70 = vmatpush1.msra.mxu0 0.0
    %71 = vmatprep.subr.mxu0 0.0
    %72 = vmatpush1.msra.mxu0 0.0
    %73 = vmatprep.subr.mxu0 0.0
    %74 = vmatpush1.msra.mxu0 0.0
    %75 = vmatprep.subr.mxu0 0.0
    %76 = vmatpush1.msra.mxu0 0.0
    %77 = vmatprep.subr.mxu0 0.0
    %78 = vmatpush1.msra.mxu0 %v49
    %79 = vmatprep.subr.mxu0 0.0
    %80 = vmatpush1.msra.mxu0 %v48
    %81 = vmatprep.subr.mxu0 0.0
    %82 = vmatpush1.msra.mxu0 %v47
    %83 = vmatprep.subr.mxu0 0.0
    %84 = vmatpush1.msra.mxu0 %v46
    %85 = vmatprep.subr.mxu0 0.0
    %86 = vmatpush1.msra.mxu0 %v45
    %87 = vmatprep.subr.mxu0 0.0
    %88 = vmatpush1.msra.mxu0 %v44
    %89 = vmatprep.subr.mxu0 0.0
    %90 = vmatpush1.msra.mxu0 %v43
    %91 = vmatprep.subr.mxu0 0.0
    %92 = vmatpush1.msra.mxu0 %v42
    %93 = vmatprep.subr.mxu0 0.0
    %94 = vmatpush2.msra.mxu0 0.0
    %95 = vmatprep.subr.mxu0 0.0
    %96 = vmatpush2.msra.mxu0 0.0
    %97 = vmatprep.subr.mxu0 0.0
    %98 = vmatpush2.msra.mxu0 0.0
    %99 = vmatprep.subr.mxu0 0.0
    %100 = vmatpush2.msra.mxu0 0.0
    %101 = vmatprep.subr.mxu0 0.0
    %102 = vmatpush2.msra.mxu0 0.0
    %103 = vmatprep.subr.mxu0 0.0
    %104 = vmatpush2.msra.mxu0 0.0
    %105 = vmatprep.subr.mxu0 0.0
    %106 = vmatpush2.msra.mxu0 0.0
    %107 = vmatprep.subr.mxu0 0.0
    %108 = vmatpush2.msra.mxu0 0.0
    %109 = vmatprep.subr.mxu0 0.0
    %110 = vmatpush2.msra.mxu0 0.0
    %111 = vmatprep.subr.mxu0 0.0
    %112 = vmatpush2.msra.mxu0 0.0
    %113 = vmatprep.subr.mxu0 0.0
    %114 = vmatpush2.msra.mxu0 0.0
    %115 = vmatprep.subr.mxu0 0.0
    %116 = vmatpush2.msra.mxu0 0.0
    %117 = vmatprep.subr.mxu0 0.0
    %118 = vmatpush2.msra.mxu0 0.0
    %119 = vmatprep.subr.mxu0 0.0
    %120 = vmatpush2.msra.mxu0 0.0
    %121 = vmatprep.subr.mxu0 0.0
    %122 = vmatpush2.msra.mxu0 0.0
    %123 = vmatprep.subr.mxu0 0.0
    %124 = vmatpush2.msra.mxu0 0.0
    %125 = vmatprep.mubr.f32.mxu0 0.0
    %126 = vmatmul.mubr.f32.gmra.mxu0 %v59
    %v127 = vpop.f32.mrf.mxu0
    %v128 = vadd.f32 %v55, %v127
    %v129 = vpop.f32.mrf.mxu0
    %130 = vdwg.mxu0
    %131 = vst [vmem:[#allocation7] sm:$0x3] %v128
    // Predicated region
    $region22: #{tpu_custom_call.1} parent=1 // pred_check
      _
    $region23: #{tpu_custom_call.1} parent=1 // pred_check_branch
      %133 = sbr.rel (0) target = $region25
    $region24: #{tpu_custom_call.1} parent=1 // pred_region
      %s135 = ssub.s32 32, 32
      %136 = vsyncadd [#allocation4], %s135
      %s138 = sshll.u32 [#allocation7], 4
      %s139 = int_to_ptr.vmem [resolvable:$true] %s138
      %141 = dma.vmem_to_hbm [thread:$0]  %s139, 32, %s3, [#allocation4]
    $region25: #{tpu_custom_call.1} parent=1 // pred_fallthru
      _
    // Predicated region
    $region26: #{tpu_custom_call.1} parent=1 // pred_check
      _
    $region27: #{tpu_custom_call.1} parent=1 // pred_check_branch
      %143 = sbr.rel (0) target = $region29
    $region28: #{tpu_custom_call.1} parent=1 // pred_region
      %144 = dma.done [#allocation4], 32
    $region29: #{tpu_custom_call.1} parent=1 // pred_fallthru
      _
    %145 = vsyncpa [#allocation3], 1
    %146 = vsyncpa [#allocation6], 1
    %147 = vsyncpa [#allocation4], 1

</llo_original>
